<compile_context>
chip_gen: v5e
topology: v5e:2x2
jax: 0.10.0
libtpu: 0.0.40
codegen_flags: <defaults>
</compile_context>

<pallas_src>
import functools

import jax
import jax.numpy as jnp
from jax import lax
from jax.experimental import pallas as pl
from jax.experimental.pallas import tpu as pltpu


# ------------------------------ tiling helpers -------------------------------
def _sublane(dtype):
    """Sublane tile for a dtype (8 for 4-byte, 16 for 2-byte, 32 for 1-byte)."""
    return {4: 8, 2: 16, 1: 32}[jnp.dtype(dtype).itemsize]


def _pick_tile(dim, preferred, align):
    """Largest tile <= preferred that divides dim and is a multiple of align;
    falls back to the full dim (always a legal block; VMEM use is bounded by
    the vmem_limit computation at the call sites)."""
    if dim <= preferred:
        return dim
    t = max(align, (preferred // align) * align)
    while t >= align:
        if dim % t == 0:
            return t
        t -= align
    return dim


def _pick_head_group(num_heads, head_dim_v, target_k=256):
    """Heads per attention grid step, chosen so the fused output-projection dot
    has contraction depth K = G*Dv close to the MXU systolic depth (256)."""
    g = 1
    for cand in range(1, num_heads + 1):
        if num_heads % cand == 0 and cand * head_dim_v <= target_k:
            g = cand
    return g


# -------------------- fused QKV projection, head-major out --------------------
def _qkv_proj_kernel(x_ref, w_ref, b_ref, q_ref, k_ref, v_ref, *,
                     head_dim_q, head_dim_v):
    del head_dim_v
    Dq = head_dim_q
    # One dot with N = 2*Dq+Dv per (row-tile, head); f32 accumulation.
    acc = jnp.dot(x_ref[...], w_ref[0], preferred_element_type=jnp.float32)
    acc = acc + b_ref[0].astype(jnp.float32)
    # Split into the three head-major outputs (static lane offsets, once/tile).
    q_ref[0] = acc[:, :Dq].astype(q_ref.dtype)
    k_ref[0] = acc[:, Dq:2 * Dq].astype(k_ref.dtype)
    v_ref[0] = acc[:, 2 * Dq:].astype(v_ref.dtype)


def qkv_projection(x2d, w_hm, b_hm, *, head_dim_q, head_dim_v):
    """x2d: [M, D]; w_hm: [H, D, 2*Dq+Dv] (per-head fused [Wq|Wk|Wv], pre-T);
    b_hm: [H, 1, 2*Dq+Dv].  Returns head-major q [H,M,Dq], k [H,M,Dq],
    v [H,M,Dv].  Grid order (row-tiles, heads) keeps the x block resident
    across the head sweep, so x is read from HBM exactly once."""
    M, D = x2d.shape
    H, _, Dqkv = w_hm.shape
    Dq, Dv = head_dim_q, head_dim_v
    itemsize = jnp.dtype(x2d.dtype).itemsize
    sub = _sublane(x2d.dtype)
    # Keep the x block around 4 MiB so double-buffering stays cheap.
    pref = min(512, max(sub, ((4 << 20) // max(1, itemsize * D)) // sub * sub))
    tm = _pick_tile(M, pref, sub)

    est = (2 * itemsize * (tm * D + D * Dqkv + Dqkv + tm * Dqkv)
           + 4 * tm * Dqkv + (4 << 20))
    vmem_limit = int(min(max(est, 32 << 20), 100 << 20))

    kernel = functools.partial(_qkv_proj_kernel, head_dim_q=Dq, head_dim_v=Dv)
    cost = pl.CostEstimate(
        flops=2 * M * D * H * Dqkv, transcendentals=0,
        bytes_accessed=itemsize * (M * D + H * D * Dqkv + M * H * Dqkv))
    return pl.pallas_call(
        kernel,
        out_shape=(jax.ShapeDtypeStruct((H, M, Dq), x2d.dtype),
                   jax.ShapeDtypeStruct((H, M, Dq), x2d.dtype),
                   jax.ShapeDtypeStruct((H, M, Dv), x2d.dtype)),
        grid=(M // tm, H),
        in_specs=[
            pl.BlockSpec((tm, D), lambda i, h: (i, 0)),       # x (read once)
            pl.BlockSpec((1, D, Dqkv), lambda i, h: (h, 0, 0)),
            pl.BlockSpec((1, 1, Dqkv), lambda i, h: (h, 0, 0)),
        ],
        out_specs=(
            pl.BlockSpec((1, tm, Dq), lambda i, h: (h, i, 0)),
            pl.BlockSpec((1, tm, Dq), lambda i, h: (h, i, 0)),
            pl.BlockSpec((1, tm, Dv), lambda i, h: (h, i, 0)),
        ),
        compiler_params=pltpu.CompilerParams(
            dimension_semantics=("parallel", "parallel"),
            vmem_limit_bytes=vmem_limit),
        cost_estimate=cost,
    )(x2d, w_hm, b_hm)


# ------------- attention + fused (batched-K) output projection ---------------
def _attn_kernel(scale_ref, q_ref, k_ref, v_ref, wo_ref, bo_ref, *rest,
                 group_size, num_groups, head_dim_v, need_weights):
    if need_weights:
        o_ref, w_ref, acc_ref = rest
    else:
        o_ref, acc_ref = rest
    G, Dv = group_size, head_dim_v
    hg = pl.program_id(2)

    @pl.when(hg == 0)
    def _():
        acc_ref[...] = jnp.zeros_like(acc_ref)

    scale = scale_ref[0]
    o_parts = []
    # Small static unroll over the heads of this group (G*Dv ~ MXU depth);
    # every iteration's temporaries die into o_parts / the weights store.
    for g in range(G):
        q = (q_ref[g, 0] * scale).astype(k_ref.dtype)        # scale folded in
        s = lax.dot_general(q, k_ref[g, 0], (((1,), (1,)), ((), ())),
                            preferred_element_type=jnp.float32)   # [tq, S]
        m = jnp.max(s, axis=-1, keepdims=True)
        e = jnp.exp(s - m)
        w = e * pl.reciprocal(jnp.sum(e, axis=-1, keepdims=True), approx=True)
        if need_weights:
            w_ref[0, g] = w.astype(w_ref.dtype)
        o_parts.append(jnp.dot(w.astype(v_ref.dtype), v_ref[g, 0],
                               preferred_element_type=jnp.float32))  # [tq, Dv]
    o_grp = o_parts[0] if G == 1 else jnp.concatenate(o_parts, axis=-1)

    # Fused output projection: ONE dot per group with K = G*Dv (~full MXU
    # systolic depth) accumulated in a VMEM f32 scratch across head groups.
    if num_groups == 1:
        wo_g = wo_ref[...]
    else:
        row0 = pl.multiple_of(hg * (G * Dv), G * Dv)
        wo_g = wo_ref[pl.ds(row0, G * Dv), :]                 # dyn sublane read
    acc_ref[...] += jnp.dot(o_grp.astype(wo_g.dtype), wo_g,
                            preferred_element_type=jnp.float32)

    @pl.when(hg == num_groups - 1)
    def _():
        o_ref[0] = (acc_ref[...] + bo_ref[...].astype(jnp.float32)
                    ).astype(o_ref.dtype)


def attention_with_output_proj(q_hm, k_hm, v_hm, wo_t, bo, scale, *,
                               need_weights=True, weights_dtype=None):
    """q_hm/k_hm: [H, B, L, Dq]; v_hm: [H, B, L, Dv]; wo_t: [H*Dv, D]; bo: [D].
    Returns (output [B, L, D], attn_weights [B, H, L, L] or None)."""
    H, B, L, Dq = q_hm.shape
    Dv = v_hm.shape[-1]
    S = L                                    # self-attention
    nv, D = wo_t.shape
    dt = q_hm.dtype
    w_dt = jnp.dtype(weights_dtype) if weights_dtype is not None else jnp.dtype(dt)
    itemsize = jnp.dtype(dt).itemsize
    sub = _sublane(dt)

    G = _pick_head_group(H, Dv, target_k=256)
    HG = H // G
    # q-tile bounded so each head's [tq, S] f32 score tile stays ~2 MiB.
    pref_tq = min(256, max(sub, ((2 << 20) // max(1, 4 * S)) // sub * sub))
    tq = _pick_tile(L, pref_tq, sub)

    blk = 2 * itemsize * (G * tq * Dq + G * S * Dq + G * S * Dv + tq * D)
    if need_weights:
        blk += 2 * w_dt.itemsize * G * tq * S
    resident = itemsize * (nv * D + D) + 4 * tq * D          # Wo, bo, f32 acc
    est = blk + resident + (4 << 20)
    vmem_limit = int(min(max(est, 32 << 20), 100 << 20))

    kernel = functools.partial(_attn_kernel, group_size=G, num_groups=HG,
                               head_dim_v=Dv, need_weights=need_weights)

    out_shape = [jax.ShapeDtypeStruct((B, L, D), dt)]
    out_specs = [pl.BlockSpec((1, tq, D), lambda b, i, hg: (b, i, 0))]
    if need_weights:
        out_shape.append(jax.ShapeDtypeStruct((B, H, L, S), w_dt))
        out_specs.append(
            pl.BlockSpec((1, G, tq, S), lambda b, i, hg: (b, hg, i, 0)))

    cost = pl.CostEstimate(
        flops=2 * B * H * L * S * (Dq + Dv) + 2 * B * L * nv * D,
        transcendentals=B * H * L * S,
        bytes_accessed=(itemsize * (B * L * (H * (2 * Dq + Dv) + D) + nv * D)
                        + (w_dt.itemsize * B * H * L * S if need_weights else 0)),
    )

    results = pl.pallas_call(
        kernel,
        out_shape=tuple(out_shape),
        grid=(B, L // tq, HG),
        in_specs=[
            pl.BlockSpec(memory_space=pltpu.MemorySpace.SMEM),          # scale
            pl.BlockSpec((G, 1, tq, Dq), lambda b, i, hg: (hg, b, i, 0)),  # q
            pl.BlockSpec((G, 1, S, Dq), lambda b, i, hg: (hg, b, 0, 0)),   # k
            pl.BlockSpec((G, 1, S, Dv), lambda b, i, hg: (hg, b, 0, 0)),   # v
            pl.BlockSpec((nv, D), lambda b, i, hg: (0, 0)),   # Wo (resident)
            pl.BlockSpec((1, D), lambda b, i, hg: (0, 0)),    # bo (resident)
        ],
        out_specs=tuple(out_specs),
        scratch_shapes=[pltpu.VMEM((tq, D), jnp.float32)],
        compiler_params=pltpu.CompilerParams(
            dimension_semantics=("parallel", "parallel", "arbitrary"),
            vmem_limit_bytes=vmem_limit),
        cost_estimate=cost,
    )(scale, q_hm, k_hm, v_hm, wo_t, bo.reshape(1, D))

    if need_weights:
        return results[0], results[1]
    return results[0], None


# -------------------------------- full module --------------------------------
def init_params(key, model_dim, num_heads, head_dim_q=None, head_dim_v=None):
    Dq = head_dim_q or model_dim // num_heads
    Dv = head_dim_v or model_dim // num_heads
    Dqkv = 2 * Dq + Dv
    ks = jax.random.split(key, 4)
    s = 0.05
    return {
        "num_heads": num_heads,
        "head_dim_q": Dq,
        "head_dim_v": Dv,
        # Head-major fused per-head [Wq_h | Wk_h | Wv_h], pre-transposed.
        "w_qkv_hm": jax.random.normal(ks[0], (num_heads, model_dim, Dqkv),
                                      jnp.float32) * s,
        "b_qkv_hm": jax.random.normal(ks[1], (num_heads, 1, Dqkv),
                                      jnp.float32) * s,
        # Output projection (pre-transposed, rows ordered (head, dv)) and bias.
        "wo_t": jax.random.normal(ks[2], (num_heads * Dv, model_dim),
                                  jnp.float32) * s,
        "bo": jax.random.normal(ks[3], (model_dim,), jnp.float32) * s,
        # scaling_factor parameter (non-learnable when LSA=False).
        "scale": jnp.array([Dq ** (-0.5)], dtype=jnp.float32),
    }


def multihead_attention(params, query, need_weights=True):
    """query: [B, L, D]. Returns (output [B,L,D], attn_weights [B,H,L,L]|None)."""
    B, L, D = query.shape
    H, Dq, Dv = params["num_heads"], params["head_dim_q"], params["head_dim_v"]

    x2d = query.reshape(B * L, D)
    q_hm, k_hm, v_hm = qkv_projection(
        x2d, params["w_qkv_hm"], params["b_qkv_hm"],
        head_dim_q=Dq, head_dim_v=Dv)
    # [H, B*L, d] -> [H, B, L, d]: contiguous split, no transpose / HBM pass.
    q_hm = q_hm.reshape(H, B, L, Dq)
    k_hm = k_hm.reshape(H, B, L, Dq)
    v_hm = v_hm.reshape(H, B, L, Dv)

    return attention_with_output_proj(
        q_hm, k_hm, v_hm, params["wo_t"], params["bo"], params["scale"],
        need_weights=need_weights)


# ---------------------------------- reference ---------------------------------
def multihead_attention_ref(params, query):
    B, L, D = query.shape
    H, Dq, Dv = params["num_heads"], params["head_dim_q"], params["head_dim_v"]
    qkv = (jnp.einsum("bld,hdk->bhlk", query, params["w_qkv_hm"])
           + params["b_qkv_hm"][:, 0][None, :, None, :])
    q = qkv[..., :Dq]
    k = qkv[..., Dq:2 * Dq]
    v = qkv[..., 2 * Dq:]
    scores = jnp.einsum("bhld,bhsd->bhls", q, k) * params["scale"][0]
    w = jax.nn.softmax(scores, axis=-1)
    o = jnp.einsum("bhls,bhsd->bhld", w, v)
    o = o.transpose(0, 2, 1, 3).reshape(B, L, H * Dv)
    return o @ params["wo_t"] + params["bo"], w


if __name__ == "__main__":
    B, L, model_dim, num_heads = 2, 8, 32, 4

    key = jax.random.PRNGKey(0)
    k_param, k_x = jax.random.split(key)
    params = init_params(k_param, model_dim, num_heads)
    query = jax.random.normal(k_x, (B, L, model_dim), jnp.float32)

    out, weights = multihead_attention(params, query, need_weights=True)
    out = jax.block_until_ready(out)
    weights = jax.block_until_ready(weights)

    out_ref, w_ref = multihead_attention_ref(params, query)
    assert out.shape == (B, L, model_dim)
    assert weights.shape == (B, num_heads, L, L)
    # approx reciprocal in the softmax denominator -> slightly looser tolerance.
    assert jnp.allclose(weights, w_ref, atol=2e-3, rtol=2e-3)
    assert jnp.allclose(out, out_ref, atol=2e-3, rtol=2e-3)

    # Fast path without the O(H*L^2) attention-weights writeback.
    out_nw, w_none = multihead_attention(params, query, need_weights=False)
    out_nw = jax.block_until_ready(out_nw)
    assert w_none is None
    assert jnp.allclose(out_nw, out_ref, atol=2e-3, rtol=2e-3)

    print("KERNEL_OK")
</pallas_src>

<mosaic_0001>
module attributes {stable_mosaic.version = 11 : i64} {
  func.func @_qkv_proj_kernel(%arg0: i32, %arg1: i32, %arg2: memref<16x32xf32, #tpu.memory_space<vmem>>, %arg3: memref<1x32x24xf32, #tpu.memory_space<vmem>>, %arg4: memref<1x1x24xf32, #tpu.memory_space<vmem>>, %arg5: memref<1x16x8xf32, #tpu.memory_space<vmem>>, %arg6: memref<1x16x8xf32, #tpu.memory_space<vmem>>, %arg7: memref<1x16x8xf32, #tpu.memory_space<vmem>>) attributes {dimension_semantics = [#tpu.dimension_semantics<parallel>, #tpu.dimension_semantics<parallel>], iteration_bounds = array<i64: 1, 4>, scalar_prefetch = 0 : i64, scratch_operands = 0 : i64, tpu.core_type = #tpu.core_type<tc>, window_params = [{transform_indices = @transform_0, window_bounds = array<i64: 16, 32>}, {transform_indices = @transform_1, window_bounds = array<i64: 1, 32, 24>}, {transform_indices = @transform_2, window_bounds = array<i64: 1, 1, 24>}, {transform_indices = @transform_3, window_bounds = array<i64: 1, 16, 8>}, {transform_indices = @transform_4, window_bounds = array<i64: 1, 16, 8>}, {transform_indices = @transform_5, window_bounds = array<i64: 1, 16, 8>}]} {
    %c0 = arith.constant 0 : index
    %c0_0 = arith.constant 0 : index
    %0 = vector.load %arg2[%c0, %c0_0] : memref<16x32xf32, #tpu.memory_space<vmem>>, vector<16x32xf32>
    %c0_1 = arith.constant 0 : index
    %c0_2 = arith.constant 0 : index
    %c0_3 = arith.constant 0 : index
    %1 = vector.load %arg3[%c0_1, %c0_2, %c0_3] : memref<1x32x24xf32, #tpu.memory_space<vmem>>, vector<1x32x24xf32>
    %2 = vector.shape_cast %1 : vector<1x32x24xf32> to vector<32x24xf32>
    %cst = arith.constant dense<0.000000e+00> : vector<16x24xf32>
    %3 = tpu.matmul %0, %2, %cst {dimension_numbers = #tpu.dot_dimension_numbers<[1], [0], [0], [1], [0, 0, 1, 1], [], []>} : vector<16x32xf32>, vector<32x24xf32>, vector<16x24xf32> -> vector<16x24xf32>
    %c0_4 = arith.constant 0 : index
    %c0_5 = arith.constant 0 : index
    %c0_6 = arith.constant 0 : index
    %4 = vector.load %arg4[%c0_4, %c0_5, %c0_6] : memref<1x1x24xf32, #tpu.memory_space<vmem>>, vector<1x1x24xf32>
    %5 = vector.shape_cast %4 : vector<1x1x24xf32> to vector<1x24xf32>
    %6 = vector.broadcast %5 : vector<1x24xf32> to vector<16x24xf32>
    %7 = arith.addf %3, %6 : vector<16x24xf32>
    %8 = vector.extract_strided_slice %7 {offsets = [0, 0], sizes = [16, 8], strides = [1, 1]} : vector<16x24xf32> to vector<16x8xf32>
    %c0_7 = arith.constant 0 : index
    %c0_8 = arith.constant 0 : index
    %c0_9 = arith.constant 0 : index
    %9 = vector.load %arg5[%c0_7, %c0_8, %c0_9] : memref<1x16x8xf32, #tpu.memory_space<vmem>>, vector<1x16x8xf32>
    %10 = vector.shape_cast %9 : vector<1x16x8xf32> to vector<16x8xf32>
    %11 = vector.shape_cast %8 : vector<16x8xf32> to vector<1x16x8xf32>
    tpu.vector_store %arg5[%c0_7, %c0_8, %c0_9], %11 {strides = array<i32>} : memref<1x16x8xf32, #tpu.memory_space<vmem>>, vector<1x16x8xf32>,
    %12 = vector.extract_strided_slice %7 {offsets = [0, 8], sizes = [16, 8], strides = [1, 1]} : vector<16x24xf32> to vector<16x8xf32>
    %c0_10 = arith.constant 0 : index
    %c0_11 = arith.constant 0 : index
    %c0_12 = arith.constant 0 : index
    %13 = vector.load %arg6[%c0_10, %c0_11, %c0_12] : memref<1x16x8xf32, #tpu.memory_space<vmem>>, vector<1x16x8xf32>
    %14 = vector.shape_cast %13 : vector<1x16x8xf32> to vector<16x8xf32>
    %15 = vector.shape_cast %12 : vector<16x8xf32> to vector<1x16x8xf32>
    tpu.vector_store %arg6[%c0_10, %c0_11, %c0_12], %15 {strides = array<i32>} : memref<1x16x8xf32, #tpu.memory_space<vmem>>, vector<1x16x8xf32>,
    %16 = vector.extract_strided_slice %7 {offsets = [0, 16], sizes = [16, 8], strides = [1, 1]} : vector<16x24xf32> to vector<16x8xf32>
    %c0_13 = arith.constant 0 : index
    %c0_14 = arith.constant 0 : index
    %c0_15 = arith.constant 0 : index
    %17 = vector.load %arg7[%c0_13, %c0_14, %c0_15] : memref<1x16x8xf32, #tpu.memory_space<vmem>>, vector<1x16x8xf32>
    %18 = vector.shape_cast %17 : vector<1x16x8xf32> to vector<16x8xf32>
    %19 = vector.shape_cast %16 : vector<16x8xf32> to vector<1x16x8xf32>
    tpu.vector_store %arg7[%c0_13, %c0_14, %c0_15], %19 {strides = array<i32>} : memref<1x16x8xf32, #tpu.memory_space<vmem>>, vector<1x16x8xf32>,
    return
  }
  func.func @transform_0(%arg0: i32, %arg1: i32) -> (i32, i32) {
    %c0_i32 = arith.constant 0 : i32
    %c0_i32_0 = arith.constant 0 : i32
    return %arg0, %c0_i32 : i32, i32
  }
  func.func @transform_1(%arg0: i32, %arg1: i32) -> (i32, i32, i32) {
    %c0_i32 = arith.constant 0 : i32
    %c0_i32_0 = arith.constant 0 : i32
    %c0_i32_1 = arith.constant 0 : i32
    return %arg1, %c0_i32, %c0_i32_0 : i32, i32, i32
  }
  func.func @transform_2(%arg0: i32, %arg1: i32) -> (i32, i32, i32) {
    %c0_i32 = arith.constant 0 : i32
    %c0_i32_0 = arith.constant 0 : i32
    %c0_i32_1 = arith.constant 0 : i32
    return %arg1, %c0_i32, %c0_i32_0 : i32, i32, i32
  }
  func.func @transform_3(%arg0: i32, %arg1: i32) -> (i32, i32, i32) {
    %c0_i32 = arith.constant 0 : i32
    %c0_i32_0 = arith.constant 0 : i32
    return %arg1, %arg0, %c0_i32 : i32, i32, i32
  }
  func.func @transform_4(%arg0: i32, %arg1: i32) -> (i32, i32, i32) {
    %c0_i32 = arith.constant 0 : i32
    %c0_i32_0 = arith.constant 0 : i32
    return %arg1, %arg0, %c0_i32 : i32, i32, i32
  }
  func.func @transform_5(%arg0: i32, %arg1: i32) -> (i32, i32, i32) {
    %c0_i32 = arith.constant 0 : i32
    %c0_i32_0 = arith.constant 0 : i32
    return %arg1, %arg0, %c0_i32 : i32, i32, i32
  }
}

</mosaic_0001>

<llo_original>
// kernel: tpu_custom_call.1
$region0: #{tpu_custom_call.1}
  #allocation0 [shape = 'u32[]', space=smem, size = 0x4, offset = 0x4, fixed_abs, tag = 'smem constant byte address 0x4 - core index']
  #allocation1 [shape = 'u32[72,128]{1,0:T(1,128)}', space=vmem, size = 0x9000, scoped, tag = 'internal scratch']
  %s0 = inlined_call_operand.vmem [shape: f32[16,32], index: 0, kind: input, shape index: {}]
  %s1 = inlined_call_operand.vmem [shape: f32[4,32,24], index: 1, kind: input, shape index: {}]
  %s2 = inlined_call_operand.vmem [shape: f32[4,1,24], index: 2, kind: input, shape index: {}]
  %s3 = inlined_call_operand.vmem [shape: f32[4,16,8], index: 3, kind: output, shape index: {0}]
  %s4 = inlined_call_operand.vmem [shape: f32[4,16,8], index: 4, kind: output, shape index: {1}]
  %s5 = inlined_call_operand.vmem [shape: f32[4,16,8], index: 5, kind: output, shape index: {2}]
  %6 = xla_tuple %s3, %s4, %s5
  %s7 = sld [smem:[#allocation0]]
  $region61: #{tpu_custom_call.1} parent=0
    _
  %s9 = ssub.s32 1, %s7
  %s10 = scalar_select 0, %s9, %s7
  loop: start=0, step=1, limit=6
  $region2: #{tpu_custom_call.1} parent=0 // loop_pre_header
    _
  $region3: #{tpu_custom_call.1} parent=0 // loop_header
    %s12 = sphi 0, %s16
    %p13 = scmp.ge.s32.totalorder %s12, 6
    %s19 = sphi 0, %s31
    %s20 = sphi 0, %s27
    %s21 = sphi 0, %s19
    %s22 = sphi 0, %s20
    %s23 = sphi 0, %s21
    %s24 = sphi 0, %s22
    %s34 = sphi 0, %s36
    %s37 = sphi 0, %s34
    %s38 = sphi 0, %s37
    %s54 = sphi 0, %s38
    %s60 = sphi 0, %s62
    %s63 = sphi 0, %s60
    %s64 = sphi 0, %s63
    %s80 = sphi 0, %s64
    %s86 = sphi 0, %s88
    %s89 = sphi 0, %s86
    %s90 = sphi 0, %s89
    %s106 = sphi 0, %s90
    %s114 = sphi 0, %s116
    %s117 = sphi 0, %s114
    %s118 = sphi 0, %s117
    %s134 = sphi 0, %s118
    %s142 = sphi 0, %s144
    %s145 = sphi 0, %s142
    %s146 = sphi 0, %s145
    %s162 = sphi 0, %s146
    %s170 = sphi 0, %s172
    %s173 = sphi 0, %s170
    %s174 = sphi 0, %s173
    %s190 = sphi 0, %s174
  $region4: #{tpu_custom_call.1} parent=0 // loop_header_branch
    %15 = sbr.rel (%p13) target = $region8
  $region5: #{tpu_custom_call.1} parent=0 // loop_body
    %s17 = ssub.s32 %s12, 1
    %s18 = ssub.s32 %s12, 2
    %s25 = sadd.s32 1, %s20
    %p26 = scmp.ge.s32.totalorder %s25, 4
    %s27 = scalar_select %p26, 0, %s25
    %s28 = sadd.s32 1, %s19
    %s29 = scalar_select %p26, %s28, %s19
    %p30 = scmp.ge.s32.totalorder %s29, 1
    %s31 = scalar_select %p30, 0, %s29
    %s32 = ssub.s32 %s19, %s31
    %p33 = scmp.eq.s32.totalorder %s32, 0
    %s35 = sadd.s32 %s34, 1
    %s36 = scalar_select %p33, %s34, %s35
    %p39 = pneg %p33
    %p40 = scmp.eq.s32.totalorder %s12, 3
    %p41 = por %p39, %p40
    %p42 = scmp.ne.s32.totalorder %s34, %s37
    %p43 = scmp.eq.s32.totalorder %s12, 0
    %p44 = por %p42, %p43
    %p45 = scmp.ne.s32.totalorder %s34, %s37
    %p46 = scmp.eq.s32.totalorder %s17, 3
    %p47 = por %p45, %p46
    %p48 = scmp.ne.s32.totalorder %s37, %s38
    %p49 = scmp.eq.s32.totalorder %s17, 0
    %p50 = por %p48, %p49
    %p51 = scmp.ne.s32.totalorder %s37, %s38
    %p52 = scmp.eq.s32.totalorder %s18, 3
    %p53 = por %p51, %p52
    %p55 = scmp.ne.s32.totalorder %s38, %s54
    %p56 = scmp.eq.s32.totalorder %s18, 0
    %p57 = por %p55, %p56
    %s58 = ssub.s32 %s20, %s27
    %p59 = scmp.eq.s32.totalorder %s58, 0
    %s61 = sadd.s32 %s60, 1
    %s62 = scalar_select %p59, %s60, %s61
    %p65 = pneg %p59
    %p66 = scmp.eq.s32.totalorder %s12, 3
    %p67 = por %p65, %p66
    %p68 = scmp.ne.s32.totalorder %s60, %s63
    %p69 = scmp.eq.s32.totalorder %s12, 0
    %p70 = por %p68, %p69
    %p71 = scmp.ne.s32.totalorder %s60, %s63
    %p72 = scmp.eq.s32.totalorder %s17, 3
    %p73 = por %p71, %p72
    %p74 = scmp.ne.s32.totalorder %s63, %s64
    %p75 = scmp.eq.s32.totalorder %s17, 0
    %p76 = por %p74, %p75
    %p77 = scmp.ne.s32.totalorder %s63, %s64
    %p78 = scmp.eq.s32.totalorder %s18, 3
    %p79 = por %p77, %p78
    %p81 = scmp.ne.s32.totalorder %s64, %s80
    %p82 = scmp.eq.s32.totalorder %s18, 0
    %p83 = por %p81, %p82
    %s84 = ssub.s32 %s20, %s27
    %p85 = scmp.eq.s32.totalorder %s84, 0
    %s87 = sadd.s32 %s86, 1
    %s88 = scalar_select %p85, %s86, %s87
    %p91 = pneg %p85
    %p92 = scmp.eq.s32.totalorder %s12, 3
    %p93 = por %p91, %p92
    %p94 = scmp.ne.s32.totalorder %s86, %s89
    %p95 = scmp.eq.s32.totalorder %s12, 0
    %p96 = por %p94, %p95
    %p97 = scmp.ne.s32.totalorder %s86, %s89
    %p98 = scmp.eq.s32.totalorder %s17, 3
    %p99 = por %p97, %p98
    %p100 = scmp.ne.s32.totalorder %s89, %s90
    %p101 = scmp.eq.s32.totalorder %s17, 0
    %p102 = por %p100, %p101
    %p103 = scmp.ne.s32.totalorder %s89, %s90
    %p104 = scmp.eq.s32.totalorder %s18, 3
    %p105 = por %p103, %p104
    %p107 = scmp.ne.s32.totalorder %s90, %s106
    %p108 = scmp.eq.s32.totalorder %s18, 0
    %p109 = por %p107, %p108
    %s110 = ssub.s32 %s20, %s27
    %s111 = ssub.s32 %s19, %s31
    %s112 = sor.u32 %s110, %s111
    %p113 = scmp.eq.s32.totalorder %s112, 0
    %s115 = sadd.s32 %s114, 1
    %s116 = scalar_select %p113, %s114, %s115
    %p119 = pneg %p113
    %p120 = scmp.eq.s32.totalorder %s12, 3
    %p121 = por %p119, %p120
    %p122 = scmp.ne.s32.totalorder %s114, %s117
    %p123 = scmp.eq.s32.totalorder %s12, 0
    %p124 = por %p122, %p123
    %p125 = scmp.ne.s32.totalorder %s114, %s117
    %p126 = scmp.eq.s32.totalorder %s17, 3
    %p127 = por %p125, %p126
    %p128 = scmp.ne.s32.totalorder %s117, %s118
    %p129 = scmp.eq.s32.totalorder %s17, 0
    %p130 = por %p128, %p129
    %p131 = scmp.ne.s32.totalorder %s117, %s118
    %p132 = scmp.eq.s32.totalorder %s18, 3
    %p133 = por %p131, %p132
    %p135 = scmp.ne.s32.totalorder %s118, %s134
    %p136 = scmp.eq.s32.totalorder %s18, 0
    %p137 = por %p135, %p136
    %s138 = ssub.s32 %s20, %s27
    %s139 = ssub.s32 %s19, %s31
    %s140 = sor.u32 %s138, %s139
    %p141 = scmp.eq.s32.totalorder %s140, 0
    %s143 = sadd.s32 %s142, 1
    %s144 = scalar_select %p141, %s142, %s143
    %p147 = pneg %p141
    %p148 = scmp.eq.s32.totalorder %s12, 3
    %p149 = por %p147, %p148
    %p150 = scmp.ne.s32.totalorder %s142, %s145
    %p151 = scmp.eq.s32.totalorder %s12, 0
    %p152 = por %p150, %p151
    %p153 = scmp.ne.s32.totalorder %s142, %s145
    %p154 = scmp.eq.s32.totalorder %s17, 3
    %p155 = por %p153, %p154
    %p156 = scmp.ne.s32.totalorder %s145, %s146
    %p157 = scmp.eq.s32.totalorder %s17, 0
    %p158 = por %p156, %p157
    %p159 = scmp.ne.s32.totalorder %s145, %s146
    %p160 = scmp.eq.s32.totalorder %s18, 3
    %p161 = por %p159, %p160
    %p163 = scmp.ne.s32.totalorder %s146, %s162
    %p164 = scmp.eq.s32.totalorder %s18, 0
    %p165 = por %p163, %p164
    %s166 = ssub.s32 %s20, %s27
    %s167 = ssub.s32 %s19, %s31
    %s168 = sor.u32 %s166, %s167
    %p169 = scmp.eq.s32.totalorder %s168, 0
    %s171 = sadd.s32 %s170, 1
    %s172 = scalar_select %p169, %s170, %s171
    %p175 = pneg %p169
    %p176 = scmp.eq.s32.totalorder %s12, 3
    %p177 = por %p175, %p176
    %p178 = scmp.ne.s32.totalorder %s170, %s173
    %p179 = scmp.eq.s32.totalorder %s12, 0
    %p180 = por %p178, %p179
    %p181 = scmp.ne.s32.totalorder %s170, %s173
    %p182 = scmp.eq.s32.totalorder %s17, 3
    %p183 = por %p181, %p182
    %p184 = scmp.ne.s32.totalorder %s173, %s174
    %p185 = scmp.eq.s32.totalorder %s17, 0
    %p186 = por %p184, %p185
    %p187 = scmp.ne.s32.totalorder %s173, %s174
    %p188 = scmp.eq.s32.totalorder %s18, 3
    %p189 = por %p187, %p188
    %p191 = scmp.ne.s32.totalorder %s174, %s190
    %p192 = scmp.eq.s32.totalorder %s18, 0
    %p193 = por %p191, %p192
    %p194 = scmp.le.s32.totalorder 1, %s12
    %p195 = scmp.lt.s32.totalorder %s12, 5
    %p196 = pnand %p194, %p195
    %p197 = pneg %p196
    // Predicated region
    $region9: #{tpu_custom_call.1} parent=5 // pred_check
      _
    $region10: #{tpu_custom_call.1} parent=5 // pred_check_branch
      %199 = sbr.rel (%p196) target = $region12
    $region11: #{tpu_custom_call.1} parent=5 // pred_region
      %s200 = ssub.s32 %s12, 1
      // Predicated region
      $region13: #{tpu_custom_call.1} parent=11 // pred_check
        %p201 = pneg %p50
      $region14: #{tpu_custom_call.1} parent=11 // pred_check_branch
        %203 = sbr.rel (%p201) target = $region16
      $region15: #{tpu_custom_call.1} parent=11 // pred_region
        %s204 = smul.u32 2, %s21
        %p205 = scmp.lt.s32.totalorder %s204, 1
        %s206 = scalar_select %p205, %s204, 1
        %s207 = smul.addr %s206, 8
        %s208 = scalar_lea.vmem %s0, %s207
        %s209 = smul.u32 2, %s21
      $region16: #{tpu_custom_call.1} parent=11 // pred_fallthru
        _
    $region12: #{tpu_custom_call.1} parent=5 // pred_fallthru
      _
    %p210 = scmp.lt.s32.totalorder %s12, 4
    // Predicated region
    $region17: #{tpu_custom_call.1} parent=5 // pred_check
      %p211 = pneg %p210
    $region18: #{tpu_custom_call.1} parent=5 // pred_check_branch
      %213 = sbr.rel (%p211) target = $region20
    $region19: #{tpu_custom_call.1} parent=5 // pred_region
      // Predicated region
      $region21: #{tpu_custom_call.1} parent=19 // pred_check
        %p214 = pneg %p70
      $region22: #{tpu_custom_call.1} parent=19 // pred_check_branch
        %216 = sbr.rel (%p214) target = $region24
      $region23: #{tpu_custom_call.1} parent=19 // pred_region
        %p217 = scmp.lt.s32.totalorder %s20, 3
        %s218 = scalar_select %p217, %s20, 3
        %s219 = smul.addr %s218, 4
        %s220 = smul.addr %s219, 8
        %s221 = scalar_lea.vmem %s1, %s220
      $region24: #{tpu_custom_call.1} parent=19 // pred_fallthru
        _
      // Predicated region
      $region25: #{tpu_custom_call.1} parent=19 // pred_check
        %p222 = pneg %p96
      $region26: #{tpu_custom_call.1} parent=19 // pred_check_branch
        %224 = sbr.rel (%p222) target = $region28
      $region27: #{tpu_custom_call.1} parent=19 // pred_region
        %p225 = scmp.lt.s32.totalorder %s20, 3
        %s226 = scalar_select %p225, %s20, 3
        %s227 = scalar_lea.vmem %s2, %s226
      $region28: #{tpu_custom_call.1} parent=19 // pred_fallthru
        _
    $region20: #{tpu_custom_call.1} parent=5 // pred_fallthru
      _
    %p228 = scmp.le.s32.totalorder 1, %s12
    %p229 = scmp.lt.s32.totalorder %s12, 5
    %p230 = pnand %p228, %p229
    %p231 = pneg %p230
    // Predicated region
    $region29: #{tpu_custom_call.1} parent=5 // pred_check
      _
    $region30: #{tpu_custom_call.1} parent=5 // pred_check_branch
      %233 = sbr.rel (%p230) target = $region32
    $region31: #{tpu_custom_call.1} parent=5 // pred_region
      %s234 = ssub.s32 %s12, 1
      %s235 = smul.u32 2, %s21
      %p236 = scmp.lt.s32.totalorder %s235, 1
      %s237 = scalar_select %p236, %s235, 1
      %s238 = smul.addr %s237, 8
      %s239 = scalar_lea.vmem %s0, %s238
      %p240 = pneg %p50
      %p241 = pneg %p47
      %p242 = scmp.lt.s32.totalorder %s22, 3
      %s243 = scalar_select %p242, %s22, 3
      %s244 = smul.addr %s243, 4
      %s245 = smul.addr %s244, 8
      %s246 = scalar_lea.vmem %s1, %s245
      %p247 = pneg %p76
      %p248 = pneg %p73
      %p249 = scmp.lt.s32.totalorder %s22, 3
      %s250 = scalar_select %p249, %s22, 3
      %s251 = scalar_lea.vmem %s2, %s250
      %p252 = pneg %p102
      %p253 = pneg %p99
      %p254 = pneg %p130
      %p255 = pneg %p127
      %s256 = smul.u32 2, %s21
      %p257 = scmp.lt.s32.totalorder %s22, 3
      %s258 = scalar_select %p257, %s22, 3
      %p259 = scmp.lt.s32.totalorder %s256, 1
      %s260 = scalar_select %p259, %s256, 1
      %s261 = smul.addr %s258, 2
      %s262 = sadd.s32 %s260, %s261
      %s263 = smul.addr %s262, 8
      %s264 = scalar_lea.vmem %s3, %s263
      %p265 = pneg %p158
      %p266 = pneg %p155
      %s267 = smul.u32 2, %s21
      %p268 = scmp.lt.s32.totalorder %s22, 3
      %s269 = scalar_select %p268, %s22, 3
      %p270 = scmp.lt.s32.totalorder %s267, 1
      %s271 = scalar_select %p270, %s267, 1
      %s272 = smul.addr %s269, 2
      %s273 = sadd.s32 %s271, %s272
      %s274 = smul.addr %s273, 8
      %s275 = scalar_lea.vmem %s4, %s274
      %p276 = pneg %p186
      %p277 = pneg %p183
      %s278 = smul.u32 2, %s21
      %p279 = scmp.lt.s32.totalorder %s22, 3
      %s280 = scalar_select %p279, %s22, 3
      %p281 = scmp.lt.s32.totalorder %s278, 1
      %s282 = scalar_select %p281, %s278, 1
      %s283 = smul.addr %s280, 2
      %s284 = sadd.s32 %s282, %s283
      %s285 = smul.addr %s284, 8
      %s286 = scalar_lea.vmem %s5, %s285
      %s287 = smul.u32 2, %s21
      %p288 = scmp.lt.s32.totalorder %s287, 1
      %s289 = scalar_select %p288, %s287, 1
      %s290 = smul.addr %s289, 8
      %s291 = scalar_lea.vmem %s0, %s290
      %s292 = smul.u32 2, %s21
      %p293 = scmp.lt.s32.totalorder %s22, 3
      %s294 = scalar_select %p293, %s22, 3
      %s295 = smul.addr %s294, 4
      %s296 = smul.addr %s295, 8
      %s297 = scalar_lea.vmem %s1, %s296
      %p298 = scmp.lt.s32.totalorder %s22, 3
      %s299 = scalar_select %p298, %s22, 3
      %s300 = scalar_lea.vmem %s2, %s299
      %s301 = smul.u32 2, %s21
      %p302 = scmp.lt.s32.totalorder %s22, 3
      %s303 = scalar_select %p302, %s22, 3
      %p304 = scmp.lt.s32.totalorder %s301, 1
      %s305 = scalar_select %p304, %s301, 1
      %s306 = smul.addr %s303, 2
      %s307 = sadd.s32 %s305, %s306
      %s308 = smul.addr %s307, 8
      %s309 = scalar_lea.vmem %s3, %s308
      %s310 = smul.u32 2, %s21
      %s311 = smul.u32 2, %s21
      %p312 = scmp.lt.s32.totalorder %s22, 3
      %s313 = scalar_select %p312, %s22, 3
      %p314 = scmp.lt.s32.totalorder %s311, 1
      %s315 = scalar_select %p314, %s311, 1
      %s316 = smul.addr %s313, 2
      %s317 = sadd.s32 %s315, %s316
      %s318 = smul.addr %s317, 8
      %s319 = scalar_lea.vmem %s4, %s318
      %s320 = smul.u32 2, %s21
      %s321 = smul.u32 2, %s21
      %p322 = scmp.lt.s32.totalorder %s22, 3
      %s323 = scalar_select %p322, %s22, 3
      %p324 = scmp.lt.s32.totalorder %s321, 1
      %s325 = scalar_select %p324, %s321, 1
      %s326 = smul.addr %s323, 2
      %s327 = sadd.s32 %s325, %s326
      %s328 = smul.addr %s327, 8
      %s329 = scalar_lea.vmem %s5, %s328
      %s330 = smul.u32 2, %s21
      %v331 = vld [vmem:[%s291] sm:$0xff]
      %v332 = vld [vmem:[%s291 + $0x8] sm:$0xff]
      %v333 = vld [vmem:[%s297] sm:$0xff]
      %v334 = vld [vmem:[%s297 + $0x8] sm:$0xff]
      %v335 = vld [vmem:[%s297 + $0x10] sm:$0xff]
      %v336 = vld [vmem:[%s297 + $0x18] sm:$0xff]
      %v337 = vld [vmem:[%s300] sm:$0x1]
      %v339 = vperm.slane %v337, 0
      %vm341 = vcmask 261120
      %v343 = vsel %vm341, %v331, 0
      %v346 = vsel %vm341, %v332, 0
      %348 = vmatpush.msra.mxu0 0.0
      %349 = vmatpush.msra.mxu0 0.0
      %350 = vmatpush.msra.mxu0 0.0
      %351 = vmatpush.msra.mxu0 0.0
      %352 = vmatpush.msra.mxu0 0.0
      %353 = vmatpush.msra.mxu0 0.0
      %354 = vmatpush.msra.mxu0 0.0
      %355 = vmatpush.msra.mxu0 0.0
      %356 = vmatpush.msra.mxu0 0.0
      %357 = vmatpush.msra.mxu0 0.0
      %358 = vmatpush.msra.mxu0 0.0
      %359 = vmatpush.msra.mxu0 0.0
      %360 = vmatpush.msra.mxu0 %v336
      %361 = vmatpush.msra.mxu0 %v335
      %362 = vmatpush.msra.mxu0 %v334
      %363 = vmatpush.msra.mxu0 %v333
      %364 = vmatmul.f32.gmra.mxu0 %v343
      %v365 = vpop.f32.mrf.mxu0
      %v366 = vadd.f32 %v339, %v365
      %367 = vmatmul.f32.gmra.mxu0 %v346
      %v368 = vpop.f32.mrf.mxu0
      %v369 = vadd.f32 %v339, %v368
      %370 = vdwg.mxu0
      %vm371 = vcmask 64512
      %372 = vst.msk [vmem:[%s309] sm:$0xff] %vm371, %v366
      %373 = vst.msk [vmem:[%s309 + $0x8] sm:$0xff] %vm371, %v369
      %376 = vrot.lane.b32.xlu0 %v366, 120
      %v377 = vpop.permute.xlu0 %376
      %378 = vrot.lane.b32.xlu0 %v369, 120
      %v379 = vpop.permute.xlu0 %378
      %382 = vst.msk [vmem:[%s319] sm:$0xff] %vm371, %v377
      %383 = vst.msk [vmem:[%s319 + $0x8] sm:$0xff] %vm371, %v379
      %384 = vrot.lane.b32.xlu0 %v366, 112
      %v385 = vpop.permute.xlu0 %384
      %386 = vrot.lane.b32.xlu0 %v369, 112
      %v387 = vpop.permute.xlu0 %386
      %390 = vst.msk [vmem:[%s329] sm:$0xff] %vm371, %v385
      %391 = vst.msk [vmem:[%s329 + $0x8] sm:$0xff] %vm371, %v387
      %s392 = smul.u32 2, %s21
      %p393 = scmp.lt.s32.totalorder %s22, 3
      %s394 = scalar_select %p393, %s22, 3
      %p395 = scmp.lt.s32.totalorder %s392, 1
      %s396 = scalar_select %p395, %s392, 1
      %s397 = smul.addr %s394, 2
      %s398 = sadd.s32 %s396, %s397
      %s399 = smul.addr %s398, 8
      %s400 = scalar_lea.vmem %s3, %s399
      %s401 = smul.u32 2, %s21
      %p402 = scmp.lt.s32.totalorder %s22, 3
      %s403 = scalar_select %p402, %s22, 3
      %p404 = scmp.lt.s32.totalorder %s401, 1
      %s405 = scalar_select %p404, %s401, 1
      %s406 = smul.addr %s403, 2
      %s407 = sadd.s32 %s405, %s406
      %s408 = smul.addr %s407, 8
      %s409 = scalar_lea.vmem %s4, %s408
      %s410 = smul.u32 2, %s21
      %p411 = scmp.lt.s32.totalorder %s22, 3
      %s412 = scalar_select %p411, %s22, 3
      %p413 = scmp.lt.s32.totalorder %s410, 1
      %s414 = scalar_select %p413, %s410, 1
      %s415 = smul.addr %s412, 2
      %s416 = sadd.s32 %s414, %s415
      %s417 = smul.addr %s416, 8
      %s418 = scalar_lea.vmem %s5, %s417
      // Predicated region
      $region33: #{tpu_custom_call.1} parent=31 // pred_check
        %p419 = pneg %p127
      $region34: #{tpu_custom_call.1} parent=31 // pred_check_branch
        %421 = sbr.rel (%p419) target = $region36
      $region35: #{tpu_custom_call.1} parent=31 // pred_region
        %s422 = smul.u32 2, %s21
      $region36: #{tpu_custom_call.1} parent=31 // pred_fallthru
        _
      // Predicated region
      $region37: #{tpu_custom_call.1} parent=31 // pred_check
        %p423 = pneg %p155
      $region38: #{tpu_custom_call.1} parent=31 // pred_check_branch
        %425 = sbr.rel (%p423) target = $region40
      $region39: #{tpu_custom_call.1} parent=31 // pred_region
        %s426 = smul.u32 2, %s21
      $region40: #{tpu_custom_call.1} parent=31 // pred_fallthru
        _
      // Predicated region
      $region41: #{tpu_custom_call.1} parent=31 // pred_check
        %p427 = pneg %p183
      $region42: #{tpu_custom_call.1} parent=31 // pred_check_branch
        %429 = sbr.rel (%p427) target = $region44
      $region43: #{tpu_custom_call.1} parent=31 // pred_region
        %s430 = smul.u32 2, %s21
      $region44: #{tpu_custom_call.1} parent=31 // pred_fallthru
        _
    $region32: #{tpu_custom_call.1} parent=5 // pred_fallthru
      _
    %p431 = scmp.le.s32.totalorder 2, %s12
    // Predicated region
    $region45: #{tpu_custom_call.1} parent=5 // pred_check
      %p432 = pneg %p431
    $region46: #{tpu_custom_call.1} parent=5 // pred_check_branch
      %434 = sbr.rel (%p432) target = $region48
    $region47: #{tpu_custom_call.1} parent=5 // pred_region
      %s435 = ssub.s32 %s12, 2
      // Predicated region
      $region49: #{tpu_custom_call.1} parent=47 // pred_check
        %p436 = pneg %p133
      $region50: #{tpu_custom_call.1} parent=47 // pred_check_branch
        %438 = sbr.rel (%p436) target = $region52
      $region51: #{tpu_custom_call.1} parent=47 // pred_region
        %s439 = smul.u32 2, %s23
        %p440 = scmp.lt.s32.totalorder %s24, 3
        %s441 = scalar_select %p440, %s24, 3
        %p442 = scmp.lt.s32.totalorder %s439, 1
        %s443 = scalar_select %p442, %s439, 1
        %s444 = smul.addr %s441, 2
        %s445 = sadd.s32 %s443, %s444
        %s446 = smul.addr %s445, 8
        %s447 = scalar_lea.vmem %s3, %s446
      $region52: #{tpu_custom_call.1} parent=47 // pred_fallthru
        _
      // Predicated region
      $region53: #{tpu_custom_call.1} parent=47 // pred_check
        %p448 = pneg %p161
      $region54: #{tpu_custom_call.1} parent=47 // pred_check_branch
        %450 = sbr.rel (%p448) target = $region56
      $region55: #{tpu_custom_call.1} parent=47 // pred_region
        %s451 = smul.u32 2, %s23
        %p452 = scmp.lt.s32.totalorder %s24, 3
        %s453 = scalar_select %p452, %s24, 3
        %p454 = scmp.lt.s32.totalorder %s451, 1
        %s455 = scalar_select %p454, %s451, 1
        %s456 = smul.addr %s453, 2
        %s457 = sadd.s32 %s455, %s456
        %s458 = smul.addr %s457, 8
        %s459 = scalar_lea.vmem %s4, %s458
      $region56: #{tpu_custom_call.1} parent=47 // pred_fallthru
        _
      // Predicated region
      $region57: #{tpu_custom_call.1} parent=47 // pred_check
        %p460 = pneg %p189
      $region58: #{tpu_custom_call.1} parent=47 // pred_check_branch
        %462 = sbr.rel (%p460) target = $region60
      $region59: #{tpu_custom_call.1} parent=47 // pred_region
        %s463 = smul.u32 2, %s23
        %p464 = scmp.lt.s32.totalorder %s24, 3
        %s465 = scalar_select %p464, %s24, 3
        %p466 = scmp.lt.s32.totalorder %s463, 1
        %s467 = scalar_select %p466, %s463, 1
        %s468 = smul.addr %s465, 2
        %s469 = sadd.s32 %s467, %s468
        %s470 = smul.addr %s469, 8
        %s471 = scalar_lea.vmem %s5, %s470
      $region60: #{tpu_custom_call.1} parent=47 // pred_fallthru
        _
    $region48: #{tpu_custom_call.1} parent=5 // pred_fallthru
      _
  $region6: #{tpu_custom_call.1} parent=0 // loop_footer
    %s16 = sadd.s32 1, %s12
  $region7: #{tpu_custom_call.1} parent=0 // loop_footer_branch
    %11 = sbr.rel target = $region3
  $region8: #{tpu_custom_call.1} parent=0 // loop_exit
    _

</llo_original>
